<compile_context>
chip_gen: v6e
topology: v6e:2x2x1
jax: 0.10.0
libtpu: 0.0.40
codegen_flags: <defaults>
</compile_context>

<pallas_src>
import jax
import jax.numpy as jnp
from jax import lax
from jax.experimental import pallas as pl
from jax.experimental.pallas import tpu as pltpu


def _round_up(x, m):
    return (x + m - 1) // m * m


def g_bot_kernel(h_ref, w_ref, b_ref, cnorm_ref, cand_ref,
                 pred_ref, dist_ref, q_sc, qn_sc):
    # featureNet(h[-1]) is computed once on tile 0; h/w/b blocks are resident
    # across the candidate grid axis, pred_ref is an accumulator-style resident
    # output, and the query + its squared norm persist in VMEM scratch.
    @pl.when(pl.program_id(0) == 0)
    def _():
        # pred = h @ W^T + b, with W kept in PyTorch (F, H) layout.
        pred = lax.dot_general(
            h_ref[...], w_ref[...],
            dimension_numbers=(((1,), (1,)), ((), ())),
            preferred_element_type=jnp.float32) + b_ref[...]
        pred_ref[...] = pred
        q = pred[-1:, :]                                     # (1, F): predictImage(encStates)[-1]
        q_sc[...] = q
        qn_sc[...] = jnp.sum(q * q, axis=-1, keepdims=True)  # (1, 1) ||q||^2

    # Squared L2 distance for this candidate tile via the MXU cross term.
    q = q_sc[...].astype(cand_ref.dtype)                     # (1, F)
    cross = lax.dot_general(                                 # (1, TN) = q @ c^T
        q, cand_ref[...],
        dimension_numbers=(((1,), (1,)), ((), ())),
        preferred_element_type=jnp.float32)
    dist_ref[...] = cnorm_ref[...] - 2.0 * cross + qn_sc[...]


def g_bot_pallas(h_last, w, b_row, cands, cnorm, *, tile_n):
    """h_last (B,H) f32, w (F,H), b_row (1,F), cands (N_pad,F), cnorm (1,N_pad)."""
    B, H = h_last.shape
    N_pad, F = cands.shape
    TN = tile_n
    assert N_pad % TN == 0
    grid = (N_pad // TN,)

    csize = jnp.dtype(cands.dtype).itemsize
    # Double-buffered candidate stream + resident small operands, with headroom.
    vmem_need = 2 * TN * (F * csize + 4) + 4 * (B * H + F * H + F + B * F + F + 1)
    vmem_limit = int(min(100 << 20, max(2 * vmem_need + (4 << 20), 32 << 20)))

    cost = pl.CostEstimate(
        flops=2 * B * H * F + 2 * N_pad * F + 3 * N_pad,
        transcendentals=0,
        bytes_accessed=csize * N_pad * F
        + 4 * (B * H + F * H + F + N_pad + B * F + N_pad),
    )

    return pl.pallas_call(
        g_bot_kernel,
        grid_spec=pltpu.PrefetchScalarGridSpec(
            num_scalar_prefetch=0,
            grid=grid,
            in_specs=[
                pl.BlockSpec((B, H), lambda i: (0, 0)),    # h[-1]     (resident)
                pl.BlockSpec((F, H), lambda i: (0, 0)),    # W (F, H)  (resident)
                pl.BlockSpec((1, F), lambda i: (0, 0)),    # bias      (resident)
                pl.BlockSpec((1, TN), lambda i: (0, i)),   # ||c||^2 tile (lane-dense)
                pl.BlockSpec((TN, F), lambda i: (i, 0)),   # candidate tile (streamed)
            ],
            out_specs=(
                pl.BlockSpec((B, F), lambda i: (0, 0)),    # pred      (resident)
                pl.BlockSpec((1, TN), lambda i: (0, i)),   # distances (lane-dense)
            ),
            scratch_shapes=[pltpu.VMEM((1, F), jnp.float32),   # query q
                            pltpu.VMEM((1, 1), jnp.float32)],  # ||q||^2
        ),
        out_shape=(jax.ShapeDtypeStruct((B, F), jnp.float32),
                   jax.ShapeDtypeStruct((1, N_pad), jnp.float32)),
        compiler_params=pltpu.CompilerParams(
            # Kept "arbitrary": q / ||q||^2 scratch carry state across the
            # candidate axis (pl.when init on tile 0). On v7x, per-tile query
            # recompute would allow "parallel" across both TCs, but the scan is
            # HBM-bandwidth bound so the gain is marginal.
            dimension_semantics=("arbitrary",),
            vmem_limit_bytes=vmem_limit),
        cost_estimate=cost,
    )(h_last, w, b_row, cnorm, cands)


def g_bot_forward(enc_states, feature_w, feature_b, pool_keys, pool_encodings,
                  *, tile_n=512):
    """Mirrors G_Bot.forward: predictImage(encStates)[-1], then nearest pool image.

    Returns (best_key, pred, dists) as device arrays — no host sync; callers
    needing PyTorch's `int(idx)` behaviour can int() the first result.
    """
    # TODO(synk): QA_Encoder (LSTM dialog encoder) is not defined in the provided
    # source; encStates (h, c) are supplied directly to forward() instead.
    h, _c = enc_states
    h_last = h[-1].astype(jnp.float32)                     # (B, H)
    # featureNetInputDropout (p=0.5) is identity at inference time.

    pool_keys = jnp.asarray(pool_keys)
    N, F = pool_encodings.shape

    # Pad the pool once to a lane-aligned, tile-aligned size and precompute
    # candidate squared norms (both could be cached offline alongside the pool).
    N_pad = _round_up(max(N, 1), 128)
    TN = min(tile_n, N_pad)
    N_pad = _round_up(N_pad, TN)
    cands = jnp.zeros((N_pad, F), pool_encodings.dtype).at[:N].set(pool_encodings)
    cnorm = jnp.full((1, N_pad), 1e30, jnp.float32).at[0, :N].set(
        jnp.sum(pool_encodings.astype(jnp.float32) ** 2, axis=-1))

    pred, dists_pad = g_bot_pallas(
        h_last, feature_w, feature_b[None, :], cands, cnorm, tile_n=TN)

    dists = dists_pad[0, :N]                               # (N,) valid distances
    best = jnp.argmin(dists)                               # device-side argmin
    best_key = pool_keys[best]                             # sorted(distances)[0]
    return best_key, pred, dists


if __name__ == "__main__":
    params = dict(vocabSize=100, embedSize=16, rnnHiddenSize=32,
                  dialogInputSize=32, numLayers=2, imgFeatureSize=64,
                  numRounds=2)
    B, N = 2, 8
    H = params['rnnHiddenSize']
    F = params['imgFeatureSize']
    L = params['numLayers']

    key = jax.random.PRNGKey(0)
    k_h, k_c, k_w, k_b, k_pool = jax.random.split(key, 5)

    # Encoder state (stand-in for QA_Encoder output), shapes (numLayers, B, H).
    h = jax.random.normal(k_h, (L, B, H), dtype=jnp.float32)
    c = jax.random.normal(k_c, (L, B, H), dtype=jnp.float32)

    # featureNet parameters in PyTorch nn.Linear layout: weight (F, H), bias (F,).
    feature_w = jax.random.normal(k_w, (F, H), dtype=jnp.float32) * (1.0 / jnp.sqrt(H))
    feature_b = jax.random.normal(k_b, (F,), dtype=jnp.float32) * 0.01

    # Synthetic image-encoding pool ("./pickles/image_encodings.p" stand-in).
    pool_keys = list(range(N))
    pool_enc = jax.random.normal(k_pool, (N, F), dtype=jnp.float32)

    best_key, pred, dists = g_bot_forward((h, c), feature_w, feature_b,
                                          pool_keys, pool_enc)
    jax.block_until_ready((best_key, pred, dists))

    # Pure-JAX reference check.
    pred_ref = h[-1] @ feature_w.T + feature_b
    d_ref = jnp.sum((pool_enc - pred_ref[-1][None, :]) ** 2, axis=-1)
    assert jnp.allclose(pred, pred_ref, atol=1e-4, rtol=1e-4), "featureNet mismatch"
    assert jnp.allclose(dists, d_ref, atol=1e-2, rtol=1e-3), "distance mismatch"
    assert int(best_key) == int(pool_keys[int(jnp.argmin(d_ref))]), "argmin mismatch"

    print("KERNEL_OK")
</pallas_src>

<mosaic_0001>
module attributes {stable_mosaic.version = 11 : i64} {
  func.func @g_bot_kernel(%arg0: i32, %arg1: memref<2x32xf32, #tpu.memory_space<vmem>>, %arg2: memref<64x32xf32, #tpu.memory_space<vmem>>, %arg3: memref<1x64xf32, #tpu.memory_space<vmem>>, %arg4: memref<1x128xf32, #tpu.memory_space<vmem>>, %arg5: memref<128x64xf32, #tpu.memory_space<vmem>>, %arg6: memref<2x64xf32, #tpu.memory_space<vmem>>, %arg7: memref<1x128xf32, #tpu.memory_space<vmem>>, %arg8: memref<1x64xf32, #tpu.memory_space<vmem>>, %arg9: memref<1x1xf32, #tpu.memory_space<vmem>>) attributes {dimension_semantics = [#tpu.dimension_semantics<arbitrary>], iteration_bounds = array<i64: 1>, scalar_prefetch = 0 : i64, scratch_operands = 2 : i64, tpu.core_type = #tpu.core_type<tc>, window_params = [{pipeline_mode = #tpu.pipeline_mode<synchronous>, transform_indices = @transform_0, window_bounds = array<i64: 2, 32>}, {pipeline_mode = #tpu.pipeline_mode<synchronous>, transform_indices = @transform_1, window_bounds = array<i64: 64, 32>}, {pipeline_mode = #tpu.pipeline_mode<synchronous>, transform_indices = @transform_2, window_bounds = array<i64: 1, 64>}, {transform_indices = @transform_3, window_bounds = array<i64: 1, 128>}, {transform_indices = @transform_4, window_bounds = array<i64: 128, 64>}, {pipeline_mode = #tpu.pipeline_mode<synchronous>, transform_indices = @transform_5, window_bounds = array<i64: 2, 64>}, {transform_indices = @transform_6, window_bounds = array<i64: 1, 128>}]} {
    %c0_i32 = arith.constant 0 : i32
    %0 = arith.cmpi eq, %arg0, %c0_i32 : i32
    %1 = arith.extui %0 : i1 to i32
    %c0_i32_0 = arith.constant 0 : i32
    %2 = arith.cmpi ne, %1, %c0_i32_0 : i32
    scf.if %2 {
      %c0_11 = arith.constant 0 : index
      %c0_12 = arith.constant 0 : index
      %14 = vector.load %arg1[%c0_11, %c0_12] : memref<2x32xf32, #tpu.memory_space<vmem>>, vector<2x32xf32>
      %c0_13 = arith.constant 0 : index
      %c0_14 = arith.constant 0 : index
      %15 = vector.load %arg2[%c0_13, %c0_14] : memref<64x32xf32, #tpu.memory_space<vmem>>, vector<64x32xf32>
      %cst_15 = arith.constant dense<0.000000e+00> : vector<2x64xf32>
      %16 = tpu.matmul %14, %15, %cst_15 {dimension_numbers = #tpu.dot_dimension_numbers<[1], [1], [0], [0], [0, 0, 1, 0], [], []>} : vector<2x32xf32>, vector<64x32xf32>, vector<2x64xf32> -> vector<2x64xf32>
      %c0_16 = arith.constant 0 : index
      %c0_17 = arith.constant 0 : index
      %17 = vector.load %arg3[%c0_16, %c0_17] : memref<1x64xf32, #tpu.memory_space<vmem>>, vector<1x64xf32>
      %18 = vector.broadcast %17 : vector<1x64xf32> to vector<2x64xf32>
      %19 = arith.addf %16, %18 : vector<2x64xf32>
      %c0_18 = arith.constant 0 : index
      %c0_19 = arith.constant 0 : index
      %20 = vector.load %arg6[%c0_18, %c0_19] : memref<2x64xf32, #tpu.memory_space<vmem>>, vector<2x64xf32>
      tpu.vector_store %arg6[%c0_18, %c0_19], %19 {strides = array<i32>} : memref<2x64xf32, #tpu.memory_space<vmem>>, vector<2x64xf32>,
      %21 = vector.extract_strided_slice %19 {offsets = [1, 0], sizes = [1, 64], strides = [1, 1]} : vector<2x64xf32> to vector<1x64xf32>
      %c0_20 = arith.constant 0 : index
      %c0_21 = arith.constant 0 : index
      %22 = vector.load %arg8[%c0_20, %c0_21] : memref<1x64xf32, #tpu.memory_space<vmem>>, vector<1x64xf32>
      tpu.vector_store %arg8[%c0_20, %c0_21], %21 {strides = array<i32>} : memref<1x64xf32, #tpu.memory_space<vmem>>, vector<1x64xf32>,
      %23 = arith.mulf %21, %21 : vector<1x64xf32>
      %cst_22 = arith.constant dense<0.000000e+00> : vector<1xf32>
      %24 = vector.multi_reduction <add>, %23, %cst_22 [1] : vector<1x64xf32> to vector<1xf32>
      %25 = vector.shape_cast %24 : vector<1xf32> to vector<1x1xf32>
      %c0_23 = arith.constant 0 : index
      %c0_24 = arith.constant 0 : index
      %26 = vector.load %arg9[%c0_23, %c0_24] : memref<1x1xf32, #tpu.memory_space<vmem>>, vector<1x1xf32>
      tpu.vector_store %arg9[%c0_23, %c0_24], %25 {strides = array<i32>} : memref<1x1xf32, #tpu.memory_space<vmem>>, vector<1x1xf32>,
    } else {
    }
    %c0 = arith.constant 0 : index
    %c0_1 = arith.constant 0 : index
    %3 = vector.load %arg8[%c0, %c0_1] : memref<1x64xf32, #tpu.memory_space<vmem>>, vector<1x64xf32>
    %c0_2 = arith.constant 0 : index
    %c0_3 = arith.constant 0 : index
    %4 = vector.load %arg5[%c0_2, %c0_3] : memref<128x64xf32, #tpu.memory_space<vmem>>, vector<128x64xf32>
    %cst = arith.constant dense<0.000000e+00> : vector<1x128xf32>
    %5 = tpu.matmul %3, %4, %cst {dimension_numbers = #tpu.dot_dimension_numbers<[1], [1], [0], [0], [0, 0, 1, 0], [], []>} : vector<1x64xf32>, vector<128x64xf32>, vector<1x128xf32> -> vector<1x128xf32>
    %c0_4 = arith.constant 0 : index
    %c0_5 = arith.constant 0 : index
    %6 = vector.load %arg4[%c0_4, %c0_5] : memref<1x128xf32, #tpu.memory_space<vmem>>, vector<1x128xf32>
    %cst_6 = arith.constant 2.000000e+00 : f32
    %7 = vector.broadcast %cst_6 : f32 to vector<1x128xf32>
    %8 = arith.mulf %7, %5 : vector<1x128xf32>
    %9 = arith.subf %6, %8 : vector<1x128xf32>
    %c0_7 = arith.constant 0 : index
    %c0_8 = arith.constant 0 : index
    %10 = vector.load %arg9[%c0_7, %c0_8] : memref<1x1xf32, #tpu.memory_space<vmem>>, vector<1x1xf32>
    %11 = vector.broadcast %10 : vector<1x1xf32> to vector<1x128xf32>
    %12 = arith.addf %9, %11 : vector<1x128xf32>
    %c0_9 = arith.constant 0 : index
    %c0_10 = arith.constant 0 : index
    %13 = vector.load %arg7[%c0_9, %c0_10] : memref<1x128xf32, #tpu.memory_space<vmem>>, vector<1x128xf32>
    tpu.vector_store %arg7[%c0_9, %c0_10], %12 {strides = array<i32>} : memref<1x128xf32, #tpu.memory_space<vmem>>, vector<1x128xf32>,
    return
  }
  func.func @transform_0(%arg0: i32) -> (i32, i32) {
    %c0_i32 = arith.constant 0 : i32
    %c0_i32_0 = arith.constant 0 : i32
    %c0_i32_1 = arith.constant 0 : i32
    return %c0_i32, %c0_i32_0 : i32, i32
  }
  func.func @transform_1(%arg0: i32) -> (i32, i32) {
    %c0_i32 = arith.constant 0 : i32
    %c0_i32_0 = arith.constant 0 : i32
    %c0_i32_1 = arith.constant 0 : i32
    return %c0_i32, %c0_i32_0 : i32, i32
  }
  func.func @transform_2(%arg0: i32) -> (i32, i32) {
    %c0_i32 = arith.constant 0 : i32
    %c0_i32_0 = arith.constant 0 : i32
    %c0_i32_1 = arith.constant 0 : i32
    return %c0_i32, %c0_i32_0 : i32, i32
  }
  func.func @transform_3(%arg0: i32) -> (i32, i32) {
    %c0_i32 = arith.constant 0 : i32
    %c0_i32_0 = arith.constant 0 : i32
    return %c0_i32, %arg0 : i32, i32
  }
  func.func @transform_4(%arg0: i32) -> (i32, i32) {
    %c0_i32 = arith.constant 0 : i32
    %c0_i32_0 = arith.constant 0 : i32
    return %arg0, %c0_i32 : i32, i32
  }
  func.func @transform_5(%arg0: i32) -> (i32, i32) {
    %c0_i32 = arith.constant 0 : i32
    %c0_i32_0 = arith.constant 0 : i32
    %c0_i32_1 = arith.constant 0 : i32
    return %c0_i32, %c0_i32_0 : i32, i32
  }
  func.func @transform_6(%arg0: i32) -> (i32, i32) {
    %c0_i32 = arith.constant 0 : i32
    %c0_i32_0 = arith.constant 0 : i32
    return %c0_i32, %arg0 : i32, i32
  }
}

</mosaic_0001>

<llo_original>
// kernel: tpu_custom_call.1
$region0: #{tpu_custom_call.1}
  #allocation0 [shape = 'u32[]', space=smem, size = 0x4, offset = 0x4, fixed_abs, tag = 'smem constant byte address 0x4 - core index']
  #allocation1 [shape = 'u32[144,128]{1,0:T(1,128)}', space=vmem, size = 0x12000, scoped, tag = 'internal scratch']
  #allocation2 [shape = 'f32[1,64]{1,0:T(1,128)}', space=vmem, size = 0x200, scoped, tag = 'scratch operand']
  #allocation3 [shape = 'f32[1,1]{1,0:T(1,128)}', space=vmem, size = 0x200, scoped, tag = 'scratch operand']
  %s0 = inlined_call_operand.vmem [shape: f32[2,32], index: 0, kind: input, shape index: {}]
  %s1 = inlined_call_operand.vmem [shape: f32[64,32], index: 1, kind: input, shape index: {}]
  %s2 = inlined_call_operand.vmem [shape: f32[1,64], index: 2, kind: input, shape index: {}]
  %s3 = inlined_call_operand.vmem [shape: f32[1,128], index: 3, kind: input, shape index: {}]
  %s4 = inlined_call_operand.vmem [shape: f32[128,64], index: 4, kind: input, shape index: {}]
  %s5 = inlined_call_operand.hbm [shape: f32[2,64], index: 5, kind: output, shape index: {0}]
  %s6 = inlined_call_operand.hbm [shape: f32[1,128], index: 6, kind: output, shape index: {1}]
  %7 = xla_tuple %s5, %s6
  %s8 = sld [smem:[#allocation0]]
  $region42: #{tpu_custom_call.1} parent=0
    _
  %s10 = ssub.s32 1, %s8
  %s11 = scalar_select 0, %s10, %s8
  $region1: #{tpu_custom_call.1} parent=0
    #allocation4 [shape = 'u8[1024]{0}', space=vmem, size = 0x400, scoped, tag = 'output window, operand 0, single buffered']
    #allocation5 [shape = 's32[1]{0}', space=sflag, size = 0x4, scoped, tag = 'scoped memory for tpu_custom_call.1']
    #allocation6 [shape = 'u8[512]{0}', space=vmem, size = 0x400, scoped, tag = 'output window, operand 1, single buffered']
    #allocation7 [shape = 's32[1]{0}', space=sflag, size = 0x4, scoped, tag = 'scoped memory for tpu_custom_call.1']
    %12 = vsyncpa [#allocation5], 0
    %13 = vsyncpa [#allocation7], 0
    // Predicated region
    $region2: #{tpu_custom_call.1} parent=1 // pred_check
      _
    $region3: #{tpu_custom_call.1} parent=1 // pred_check_branch
      %15 = sbr.rel (0) target = $region5
    $region4: #{tpu_custom_call.1} parent=1 // pred_region
      _
    $region5: #{tpu_custom_call.1} parent=1 // pred_fallthru
      _
    // Predicated region
    $region6: #{tpu_custom_call.1} parent=1 // pred_check
      _
    $region7: #{tpu_custom_call.1} parent=1 // pred_check_branch
      %17 = sbr.rel (0) target = $region9
    $region8: #{tpu_custom_call.1} parent=1 // pred_region
      _
    $region9: #{tpu_custom_call.1} parent=1 // pred_fallthru
      _
    // Predicated region
    $region10: #{tpu_custom_call.1} parent=1 // pred_check
      _
    $region11: #{tpu_custom_call.1} parent=1 // pred_check_branch
      %19 = sbr.rel (0) target = $region13
    $region12: #{tpu_custom_call.1} parent=1 // pred_region
      _
    $region13: #{tpu_custom_call.1} parent=1 // pred_fallthru
      _
    // Predicated region
    $region14: #{tpu_custom_call.1} parent=1 // pred_check
      _
    $region15: #{tpu_custom_call.1} parent=1 // pred_check_branch
      %21 = sbr.rel (0) target = $region17
    $region16: #{tpu_custom_call.1} parent=1 // pred_region
      _
    $region17: #{tpu_custom_call.1} parent=1 // pred_fallthru
      _
    // Predicated region
    $region18: #{tpu_custom_call.1} parent=1 // pred_check
      _
    $region19: #{tpu_custom_call.1} parent=1 // pred_check_branch
      %23 = sbr.rel (0) target = $region21
    $region20: #{tpu_custom_call.1} parent=1 // pred_region
      _
    $region21: #{tpu_custom_call.1} parent=1 // pred_fallthru
      _
    %p24 = scmp.eq.s32.totalorder 0, 0
    // Predicated region
    $region22: #{tpu_custom_call.1} parent=1 // pred_check
      %p25 = pneg %p24
    $region23: #{tpu_custom_call.1} parent=1 // pred_check_branch
      %27 = sbr.rel (%p25) target = $region25
    $region24: #{tpu_custom_call.1} parent=1 // pred_region
      %v28 = vld [vmem:[%s0] sm:$0x3]
      %v29 = vld [vmem:[%s1] sm:$0xff]
      %v30 = vld [vmem:[%s1 + $0x8] sm:$0xff]
      %v31 = vld [vmem:[%s1 + $0x10] sm:$0xff]
      %v32 = vld [vmem:[%s1 + $0x18] sm:$0xff]
      %v33 = vld [vmem:[%s1 + $0x20] sm:$0xff]
      %v34 = vld [vmem:[%s1 + $0x28] sm:$0xff]
      %v35 = vld [vmem:[%s1 + $0x30] sm:$0xff]
      %v36 = vld [vmem:[%s1 + $0x38] sm:$0xff]
      %v37 = vld [vmem:[%s2] sm:$0x1]
      %v39 = vlaneseq
      %v40 = vshrl.u32 %v39, 7
      %v41 = vsub.s32 0, %v40
      %v42 = vrot.slane %v37, %v41
      %vm44 = vcmask 261120
      %v46 = vsel %vm44, %v28, 0
      %v49 = vsel %vm44, %v29, 0
      %v52 = vsel %vm44, %v30, 0
      %v55 = vsel %vm44, %v31, 0
      %v58 = vsel %vm44, %v32, 0
      %v61 = vsel %vm44, %v33, 0
      %v64 = vsel %vm44, %v34, 0
      %v67 = vsel %vm44, %v35, 0
      %v70 = vsel %vm44, %v36, 0
      %72 = vmatprep.subr.mxu0 0.0
      %73 = vmatpush1.xpose.msra.mxu0 0.0
      %74 = vmatprep.subr.mxu0 0.0
      %75 = vmatpush1.xpose.msra.mxu0 0.0
      %76 = vmatprep.subr.mxu0 0.0
      %77 = vmatpush1.xpose.msra.mxu0 0.0
      %78 = vmatprep.subr.mxu0 0.0
      %79 = vmatpush1.xpose.msra.mxu0 0.0
      %80 = vmatprep.subr.mxu0 0.0
      %81 = vmatpush1.xpose.msra.mxu0 0.0
      %82 = vmatprep.subr.mxu0 0.0
      %83 = vmatpush1.xpose.msra.mxu0 0.0
      %84 = vmatprep.subr.mxu0 0.0
      %85 = vmatpush1.xpose.msra.mxu0 0.0
      %86 = vmatprep.subr.mxu0 0.0
      %87 = vmatpush1.xpose.msra.mxu0 0.0
      %88 = vmatprep.subr.mxu0 0.0
      %89 = vmatpush1.xpose.msra.mxu0 %v70
      %90 = vmatprep.subr.mxu0 0.0
      %91 = vmatpush1.xpose.msra.mxu0 %v67
      %92 = vmatprep.subr.mxu0 0.0
      %93 = vmatpush1.xpose.msra.mxu0 %v64
      %94 = vmatprep.subr.mxu0 0.0
      %95 = vmatpush1.xpose.msra.mxu0 %v61
      %96 = vmatprep.subr.mxu0 0.0
      %97 = vmatpush1.xpose.msra.mxu0 %v58
      %98 = vmatprep.subr.mxu0 0.0
      %99 = vmatpush1.xpose.msra.mxu0 %v55
      %100 = vmatprep.subr.mxu0 0.0
      %101 = vmatpush1.xpose.msra.mxu0 %v52
      %102 = vmatprep.subr.mxu0 0.0
      %103 = vmatpush1.xpose.msra.mxu0 %v49
      %104 = vmatprep.subr.mxu0 0.0
      %105 = vmatpush2.xpose.msra.mxu0 0.0
      %106 = vmatprep.subr.mxu0 0.0
      %107 = vmatpush2.xpose.msra.mxu0 0.0
      %108 = vmatprep.subr.mxu0 0.0
      %109 = vmatpush2.xpose.msra.mxu0 0.0
      %110 = vmatprep.subr.mxu0 0.0
      %111 = vmatpush2.xpose.msra.mxu0 0.0
      %112 = vmatprep.subr.mxu0 0.0
      %113 = vmatpush2.xpose.msra.mxu0 0.0
      %114 = vmatprep.subr.mxu0 0.0
      %115 = vmatpush2.xpose.msra.mxu0 0.0
      %116 = vmatprep.subr.mxu0 0.0
      %117 = vmatpush2.xpose.msra.mxu0 0.0
      %118 = vmatprep.subr.mxu0 0.0
      %119 = vmatpush2.xpose.msra.mxu0 0.0
      %120 = vmatprep.subr.mxu0 0.0
      %121 = vmatpush2.xpose.msra.mxu0 0.0
      %122 = vmatprep.subr.mxu0 0.0
      %123 = vmatpush2.xpose.msra.mxu0 0.0
      %124 = vmatprep.subr.mxu0 0.0
      %125 = vmatpush2.xpose.msra.mxu0 0.0
      %126 = vmatprep.subr.mxu0 0.0
      %127 = vmatpush2.xpose.msra.mxu0 0.0
      %128 = vmatprep.subr.mxu0 0.0
      %129 = vmatpush2.xpose.msra.mxu0 0.0
      %130 = vmatprep.subr.mxu0 0.0
      %131 = vmatpush2.xpose.msra.mxu0 0.0
      %132 = vmatprep.subr.mxu0 0.0
      %133 = vmatpush2.xpose.msra.mxu0 0.0
      %134 = vmatprep.subr.mxu0 0.0
      %135 = vmatpush2.xpose.msra.mxu0 0.0
      %136 = vmatprep.mubr.f32.mxu0 0.0
      %137 = vmatmul.mubr.f32.gmra.mxu0 %v46
      %v138 = vpop.f32.mrf.mxu0
      %v139 = vadd.f32 %v42, %v138
      %v140 = vpop.f32.mrf.mxu0
      %141 = vdwg.mxu0
      %vm142 = vcmask 517120
      %143 = vst.msk [vmem:[#allocation4] sm:$0x3] %vm142, %v139
      %vm144 = vcmask 517121
      %145 = vst.msk [vmem:[#allocation2 - $0x1] sm:$0x2] %vm144, %v139
      %v146 = vmul.f32 %v139, %v139
      %v147 = vsel %vm144, %v146, 0.0
      %148 = vadd.xlane.f32.xlu0 %v147
      %v149 = vpop.xlane.xlu0 %148
      %vm150 = vcmask 1025
      %151 = vst.msk [vmem:[#allocation3 - $0x1] sm:$0x2] %vm150, %v149
    $region25: #{tpu_custom_call.1} parent=1 // pred_fallthru
      _
    %v152 = vld [vmem:[#allocation2] sm:$0x1]
    %v153 = vld [vmem:[%s4] sm:$0xff]
    %v154 = vld [vmem:[%s4 + $0x8] sm:$0xff]
    %v155 = vld [vmem:[%s4 + $0x10] sm:$0xff]
    %v156 = vld [vmem:[%s4 + $0x18] sm:$0xff]
    %v157 = vld [vmem:[%s4 + $0x20] sm:$0xff]
    %v158 = vld [vmem:[%s4 + $0x28] sm:$0xff]
    %v159 = vld [vmem:[%s4 + $0x30] sm:$0xff]
    %v160 = vld [vmem:[%s4 + $0x38] sm:$0xff]
    %v161 = vld [vmem:[%s4 + $0x40] sm:$0xff]
    %v162 = vld [vmem:[%s4 + $0x48] sm:$0xff]
    %v163 = vld [vmem:[%s4 + $0x50] sm:$0xff]
    %v164 = vld [vmem:[%s4 + $0x58] sm:$0xff]
    %v165 = vld [vmem:[%s4 + $0x60] sm:$0xff]
    %v166 = vld [vmem:[%s4 + $0x68] sm:$0xff]
    %v167 = vld [vmem:[%s4 + $0x70] sm:$0xff]
    %v168 = vld [vmem:[%s4 + $0x78] sm:$0xff]
    %vm169 = vcmask 523264
    %v171 = vsel %vm169, %v152, 0
    %v174 = vsel %vm169, %v153, 0
    %v177 = vsel %vm169, %v154, 0
    %v180 = vsel %vm169, %v155, 0
    %v183 = vsel %vm169, %v156, 0
    %v186 = vsel %vm169, %v157, 0
    %v189 = vsel %vm169, %v158, 0
    %v192 = vsel %vm169, %v159, 0
    %v195 = vsel %vm169, %v160, 0
    %v198 = vsel %vm169, %v161, 0
    %v201 = vsel %vm169, %v162, 0
    %v204 = vsel %vm169, %v163, 0
    %v207 = vsel %vm169, %v164, 0
    %v210 = vsel %vm169, %v165, 0
    %v213 = vsel %vm169, %v166, 0
    %v216 = vsel %vm169, %v167, 0
    %v219 = vsel %vm169, %v168, 0
    %221 = vmatprep.subr.mxu0 0.0
    %222 = vmatpush1.xpose.msra.mxu0 %v219
    %223 = vmatprep.subr.mxu0 0.0
    %224 = vmatpush1.xpose.msra.mxu0 %v216
    %225 = vmatprep.subr.mxu0 0.0
    %226 = vmatpush1.xpose.msra.mxu0 %v213
    %227 = vmatprep.subr.mxu0 0.0
    %228 = vmatpush1.xpose.msra.mxu0 %v210
    %229 = vmatprep.subr.mxu0 0.0
    %230 = vmatpush1.xpose.msra.mxu0 %v207
    %231 = vmatprep.subr.mxu0 0.0
    %232 = vmatpush1.xpose.msra.mxu0 %v204
    %233 = vmatprep.subr.mxu0 0.0
    %234 = vmatpush1.xpose.msra.mxu0 %v201
    %235 = vmatprep.subr.mxu0 0.0
    %236 = vmatpush1.xpose.msra.mxu0 %v198
    %237 = vmatprep.subr.mxu0 0.0
    %238 = vmatpush1.xpose.msra.mxu0 %v195
    %239 = vmatprep.subr.mxu0 0.0
    %240 = vmatpush1.xpose.msra.mxu0 %v192
    %241 = vmatprep.subr.mxu0 0.0
    %242 = vmatpush1.xpose.msra.mxu0 %v189
    %243 = vmatprep.subr.mxu0 0.0
    %244 = vmatpush1.xpose.msra.mxu0 %v186
    %245 = vmatprep.subr.mxu0 0.0
    %246 = vmatpush1.xpose.msra.mxu0 %v183
    %247 = vmatprep.subr.mxu0 0.0
    %248 = vmatpush1.xpose.msra.mxu0 %v180
    %249 = vmatprep.subr.mxu0 0.0
    %250 = vmatpush1.xpose.msra.mxu0 %v177
    %251 = vmatprep.subr.mxu0 0.0
    %252 = vmatpush1.xpose.msra.mxu0 %v174
    %253 = vmatprep.subr.mxu0 0.0
    %254 = vmatpush2.xpose.msra.mxu0 0.0
    %255 = vmatprep.subr.mxu0 0.0
    %256 = vmatpush2.xpose.msra.mxu0 0.0
    %257 = vmatprep.subr.mxu0 0.0
    %258 = vmatpush2.xpose.msra.mxu0 0.0
    %259 = vmatprep.subr.mxu0 0.0
    %260 = vmatpush2.xpose.msra.mxu0 0.0
    %261 = vmatprep.subr.mxu0 0.0
    %262 = vmatpush2.xpose.msra.mxu0 0.0
    %263 = vmatprep.subr.mxu0 0.0
    %264 = vmatpush2.xpose.msra.mxu0 0.0
    %265 = vmatprep.subr.mxu0 0.0
    %266 = vmatpush2.xpose.msra.mxu0 0.0
    %267 = vmatprep.subr.mxu0 0.0
    %268 = vmatpush2.xpose.msra.mxu0 0.0
    %269 = vmatprep.subr.mxu0 0.0
    %270 = vmatpush2.xpose.msra.mxu0 0.0
    %271 = vmatprep.subr.mxu0 0.0
    %272 = vmatpush2.xpose.msra.mxu0 0.0
    %273 = vmatprep.subr.mxu0 0.0
    %274 = vmatpush2.xpose.msra.mxu0 0.0
    %275 = vmatprep.subr.mxu0 0.0
    %276 = vmatpush2.xpose.msra.mxu0 0.0
    %277 = vmatprep.subr.mxu0 0.0
    %278 = vmatpush2.xpose.msra.mxu0 0.0
    %279 = vmatprep.subr.mxu0 0.0
    %280 = vmatpush2.xpose.msra.mxu0 0.0
    %281 = vmatprep.subr.mxu0 0.0
    %282 = vmatpush2.xpose.msra.mxu0 0.0
    %283 = vmatprep.subr.mxu0 0.0
    %284 = vmatpush2.xpose.msra.mxu0 0.0
    %285 = vmatprep.mubr.f32.mxu0 0.0
    %286 = vmatmul.mubr.f32.gmra.mxu0 %v171
    %v287 = vpop.f32.mrf.mxu0
    %v288 = vadd.f32 0.0, %v287
    %v289 = vpop.f32.mrf.mxu0
    %290 = vdwg.mxu0
    %v291 = vld [vmem:[%s3] sm:$0x1]
    %v292 = vmul.f32 %v288, 2.0
    %v293 = vsub.f32 %v291, %v292
    %v294 = vld [vmem:[#allocation3] sm:$0x1]
    %296 = vset.pattern.permute.xlu0 0
    %297 = vperm.xlu0 %296, %v294
    %v298 = vpop.permute.xlu0 %297
    %v300 = vlaneseq
    %v301 = vshrl.u32 %v300, 7
    %v302 = vsub.s32 0, %v301
    %v303 = vrot.slane %v298, %v302
    %v304 = vadd.f32 %v293, %v303
    %305 = vst [vmem:[#allocation6] sm:$0x1] %v304
    // Predicated region
    $region26: #{tpu_custom_call.1} parent=1 // pred_check
      _
    $region27: #{tpu_custom_call.1} parent=1 // pred_check_branch
      %307 = sbr.rel (0) target = $region29
    $region28: #{tpu_custom_call.1} parent=1 // pred_region
      %s309 = ssub.s32 32, 32
      %310 = vsyncadd [#allocation5], %s309
      %s312 = sshll.u32 [#allocation4], 4
      %s313 = int_to_ptr.vmem [resolvable:$true] %s312
      %315 = dma.vmem_to_hbm [thread:$0]  %s313, 32, %s5, [#allocation5]
    $region29: #{tpu_custom_call.1} parent=1 // pred_fallthru
      _
    // Predicated region
    $region30: #{tpu_custom_call.1} parent=1 // pred_check
      _
    $region31: #{tpu_custom_call.1} parent=1 // pred_check_branch
      %317 = sbr.rel (0) target = $region33
    $region32: #{tpu_custom_call.1} parent=1 // pred_region
      %s319 = ssub.s32 16, 16
      %320 = vsyncadd [#allocation7], %s319
      %s322 = sshll.u32 [#allocation6], 4
      %s323 = int_to_ptr.vmem [resolvable:$true] %s322
      %325 = dma.vmem_to_hbm [thread:$0]  %s323, 16, %s6, [#allocation7]
    $region33: #{tpu_custom_call.1} parent=1 // pred_fallthru
      _
    // Predicated region
    $region34: #{tpu_custom_call.1} parent=1 // pred_check
      _
    $region35: #{tpu_custom_call.1} parent=1 // pred_check_branch
      %327 = sbr.rel (0) target = $region37
    $region36: #{tpu_custom_call.1} parent=1 // pred_region
      %328 = dma.done [#allocation5], 32
    $region37: #{tpu_custom_call.1} parent=1 // pred_fallthru
      _
    // Predicated region
    $region38: #{tpu_custom_call.1} parent=1 // pred_check
      _
    $region39: #{tpu_custom_call.1} parent=1 // pred_check_branch
      %330 = sbr.rel (0) target = $region41
    $region40: #{tpu_custom_call.1} parent=1 // pred_region
      %331 = dma.done [#allocation7], 16
    $region41: #{tpu_custom_call.1} parent=1 // pred_fallthru
      _
    %332 = vsyncpa [#allocation5], 1
    %333 = vsyncpa [#allocation7], 1

</llo_original>
